<compile_context>
chip_gen: v7x
topology: tpu7x:2x2x1
jax: 0.10.0
libtpu: 0.0.40
codegen_flags: <defaults>
</compile_context>

<pallas_src>
import functools
import math

import jax
import jax.numpy as jnp
from jax.experimental import pallas as pl
from jax.experimental.pallas import tpu as pltpu

F32 = jnp.float32
BF16 = jnp.bfloat16
LN_EPS = 1e-5
NEG_INF = -1e30


# ----------------------------- in-kernel helpers ----------------------------


def _bf_matmul(a, b):
    """(M,K)@(K,N) with bf16 MXU inputs, f32 accumulation."""
    return jax.lax.dot_general(
        a.astype(BF16), b.astype(BF16),
        dimension_numbers=(((1,), (0,)), ((), ())),
        preferred_element_type=jnp.float32)


def _bf_dot_nt(a, b):
    """(M,K)·(N,K)^T -> (M,N), bf16 inputs, f32 accumulation (no explicit transpose)."""
    return jax.lax.dot_general(
        a.astype(BF16), b.astype(BF16),
        dimension_numbers=(((1,), (1,)), ((), ())),
        preferred_element_type=jnp.float32)


def _gelu(x):  # exact (erf) GELU, matches torch F.gelu default
    return 0.5 * x * (1.0 + jax.lax.erf(x * (1.0 / math.sqrt(2.0))))


def _elu(x):   # torch nn.ELU(alpha=1); clamp arg of exp to avoid inf in dead branch
    return jnp.where(x > 0.0, x, jnp.exp(jnp.minimum(x, 0.0)) - 1.0)


def _layernorm(x, g, b):
    mean = jnp.mean(x, axis=-1, keepdims=True)
    var = jnp.mean((x - mean) ** 2, axis=-1, keepdims=True)
    return (x - mean) * jax.lax.rsqrt(var + LN_EPS) * g + b


def _shift_prev(x):  # row t -> x[t-1]  (circular), built from static slices in VMEM
    return jnp.concatenate([x[-1:, :], x[:-1, :]], axis=0)


def _shift_next(x):  # row t -> x[t+1]  (circular)
    return jnp.concatenate([x[1:, :], x[:1, :]], axis=0)


def _row_tile(rows):
    for t in (512, 256, 128):
        if rows % t == 0:
            return t
    return rows


def _attn_block(x_q, x_kv, wq, bq, wkv, bkv, wo, bo, g, bln, *, n_heads, causal):
    """One attention sub-layer on VMEM-resident data: proj + softmax attn + out-proj
    + residual + LayerNorm.  Returns the normalized (Lq, D) output."""
    lq, dm = x_q.shape
    lk = x_kv.shape[0]
    e = dm // n_heads
    scale = 1.0 / math.sqrt(e)

    q = _bf_matmul(x_q, wq) + bq          # (Lq, D)
    kv = _bf_matmul(x_kv, wkv) + bkv      # (Lk, 2D) fused k/v projection
    k = kv[:, :dm]
    v = kv[:, dm:]

    if causal:
        row = jax.lax.broadcasted_iota(jnp.int32, (lq, lk), 0)
        col = jax.lax.broadcasted_iota(jnp.int32, (lq, lk), 1)
        mask = jnp.where(col <= row, 0.0, NEG_INF).astype(jnp.float32)

    heads = []
    for h in range(n_heads):              # static unroll over heads
        qh = q[:, h * e:(h + 1) * e]
        kh = k[:, h * e:(h + 1) * e]
        vh = v[:, h * e:(h + 1) * e]
        s = _bf_dot_nt(qh, kh) * scale    # (Lq, Lk) f32 scores
        if causal:
            s = s + mask
        m = jnp.max(s, axis=-1, keepdims=True)
        p = jnp.exp(s - m)
        p = p * pl.reciprocal(jnp.sum(p, axis=-1, keepdims=True), approx=True)
        heads.append(_bf_matmul(p, vh))   # (Lq, E) f32
    attn = jnp.concatenate(heads, axis=-1)  # (Lq, D), lane-dense

    y = x_q + _bf_matmul(attn, wo) + bo
    return _layernorm(y, g, bln)


# ------------------------------- Pallas kernels ------------------------------


def _embed_kernel(x_ref, w0_ref, w1_ref, w2_ref, b_ref, pe_ref, o_ref):
    """TokenEmbedding: circular conv(k=3) + folded BN + positional encoding add."""
    x = x_ref[0]                                  # (L, Cin)
    y = (_bf_matmul(_shift_prev(x), w0_ref[...])
         + _bf_matmul(x, w1_ref[...])
         + _bf_matmul(_shift_next(x), w2_ref[...])
         + b_ref[...] + pe_ref[...])
    o_ref[0] = y


def _mha_kernel(q_ref, kv_ref, wq_ref, bq_ref, wkv_ref, bkv_ref,
                wo_ref, bo_ref, g_ref, bln_ref, o_ref, *, n_heads, causal):
    """Fused MHA block for one batch: projections + attention + out-proj + res + LN."""
    o_ref[0] = _attn_block(
        q_ref[0], kv_ref[0],
        wq_ref[...], bq_ref[...], wkv_ref[...], bkv_ref[...],
        wo_ref[...], bo_ref[...], g_ref[...], bln_ref[...],
        n_heads=n_heads, causal=causal)


def _dec_attn_kernel(x_ref, cross_ref,
                     wq1_ref, bq1_ref, wkv1_ref, bkv1_ref, wo1_ref, bo1_ref,
                     g1_ref, b1_ref,
                     wq2_ref, bq2_ref, wkv2_ref, bkv2_ref, wo2_ref, bo2_ref,
                     g2_ref, b2_ref,
                     o_ref, *, n_heads):
    """Decoder layer attention: causal self-attn + cross-attn fused per batch."""
    x = _attn_block(
        x_ref[0], x_ref[0],
        wq1_ref[...], bq1_ref[...], wkv1_ref[...], bkv1_ref[...],
        wo1_ref[...], bo1_ref[...], g1_ref[...], b1_ref[...],
        n_heads=n_heads, causal=True)
    o_ref[0] = _attn_block(
        x, cross_ref[0],
        wq2_ref[...], bq2_ref[...], wkv2_ref[...], bkv2_ref[...],
        wo2_ref[...], bo2_ref[...], g2_ref[...], b2_ref[...],
        n_heads=n_heads, causal=False)


def _ffn_kernel(x_ref, w1_ref, b1_ref, w2_ref, b2_ref, g_ref, bln_ref, o_ref,
                *, activation):
    """Fused FFN block: ff1 + act + ff2 + residual + LayerNorm on a row tile."""
    x = x_ref[...]                                # (bm, D) f32
    h = _bf_matmul(x, w1_ref[...]) + b1_ref[...]
    h = _gelu(h) if activation == "gelu" else jnp.maximum(h, 0.0)
    y = x + _bf_matmul(h, w2_ref[...]) + b2_ref[...]
    o_ref[...] = _layernorm(y, g_ref[...], bln_ref[...])


def _ffn_final_ln_kernel(x_ref, w1_ref, b1_ref, w2_ref, b2_ref, g_ref, bln_ref,
                         g2_ref, b2ln_ref, o_ref, *, activation):
    """FFN block + the encoder's final LayerNorm fused on a row tile."""
    x = x_ref[...]
    h = _bf_matmul(x, w1_ref[...]) + b1_ref[...]
    h = _gelu(h) if activation == "gelu" else jnp.maximum(h, 0.0)
    y = x + _bf_matmul(h, w2_ref[...]) + b2_ref[...]
    y = _layernorm(y, g_ref[...], bln_ref[...])
    o_ref[...] = _layernorm(y, g2_ref[...], b2ln_ref[...])


def _distill_kernel(x_ref, w0_ref, w1_ref, w2_ref, b_ref, o_ref, *, l_out):
    """Informer ConvLayer: circular conv + folded BN + ELU + MaxPool1d(3,2,pad=1)."""
    x = x_ref[0]                                  # (L, D)
    y = (_bf_matmul(_shift_prev(x), w0_ref[...])
         + _bf_matmul(x, w1_ref[...])
         + _bf_matmul(_shift_next(x), w2_ref[...])
         + b_ref[...])
    y = _elu(y)
    # neighborhood max with -inf borders: a[t] = max(y[t-1], y[t], y[t+1])
    pad = jnp.full((1, y.shape[-1]), NEG_INF, dtype=y.dtype)
    ym1 = jnp.concatenate([pad, y[:-1, :]], axis=0)
    yp1 = jnp.concatenate([y[1:, :], pad], axis=0)
    a = jnp.maximum(jnp.maximum(ym1, y), yp1)
    # stride-2 selection of even rows (static unroll; data already in VMEM)
    rows = [a[2 * i:2 * i + 1, :] for i in range(l_out)]
    o_ref[0] = jnp.concatenate(rows, axis=0)


def _ln_kernel(x_ref, g_ref, b_ref, o_ref):
    o_ref[...] = _layernorm(x_ref[...], g_ref[...], b_ref[...])


def _ln_proj_kernel(x_ref, g_ref, b_ref, w_ref, bp_ref, o_ref):
    xn = _layernorm(x_ref[...], g_ref[...], b_ref[...])
    o_ref[...] = _bf_matmul(xn, w_ref[...]) + bp_ref[...]


# ------------------------------ kernel wrappers ------------------------------


def pallas_embed(x, p, pe_slice):
    B, L, Cin = x.shape
    D = p["w1"].shape[1]
    wspec = lambda shape: pl.BlockSpec(shape, lambda b: (0, 0))
    return pl.pallas_call(
        _embed_kernel,
        out_shape=jax.ShapeDtypeStruct((B, L, D), F32),
        grid=(B,),
        in_specs=[pl.BlockSpec((1, L, Cin), lambda b: (b, 0, 0)),
                  wspec((Cin, D)), wspec((Cin, D)), wspec((Cin, D)),
                  wspec((1, D)), wspec((L, D))],
        out_specs=pl.BlockSpec((1, L, D), lambda b: (b, 0, 0)),
        compiler_params=pltpu.CompilerParams(dimension_semantics=("parallel",)),
    )(x, p["w0"], p["w1"], p["w2"], p["b"], pe_slice)


def pallas_mha_block(q_in, kv_in, p_attn, p_ln, n_heads, causal):
    B, Lq, D = q_in.shape
    Lk = kv_in.shape[1]
    wspec = lambda shape: pl.BlockSpec(shape, lambda b: (0, 0))
    return pl.pallas_call(
        functools.partial(_mha_kernel, n_heads=n_heads, causal=causal),
        out_shape=jax.ShapeDtypeStruct((B, Lq, D), F32),
        grid=(B,),
        in_specs=[pl.BlockSpec((1, Lq, D), lambda b: (b, 0, 0)),
                  pl.BlockSpec((1, Lk, D), lambda b: (b, 0, 0)),
                  wspec((D, D)), wspec((1, D)),
                  wspec((D, 2 * D)), wspec((1, 2 * D)),
                  wspec((D, D)), wspec((1, D)),
                  wspec((1, D)), wspec((1, D))],
        out_specs=pl.BlockSpec((1, Lq, D), lambda b: (b, 0, 0)),
        compiler_params=pltpu.CompilerParams(dimension_semantics=("parallel",)),
    )(q_in, kv_in, p_attn["wq"], p_attn["bq"], p_attn["wkv"], p_attn["bkv"],
      p_attn["wo"], p_attn["bo"], p_ln["g"], p_ln["b"])


def pallas_dec_attn(x, cross, p_self, p_cross, p_ln1, p_ln2, n_heads):
    """Fused decoder-layer attention: causal self-attn + cross-attn, grid over batch."""
    B, Ld, D = x.shape
    Le = cross.shape[1]
    wspec = lambda shape: pl.BlockSpec(shape, lambda b: (0, 0))
    return pl.pallas_call(
        functools.partial(_dec_attn_kernel, n_heads=n_heads),
        out_shape=jax.ShapeDtypeStruct((B, Ld, D), F32),
        grid=(B,),
        in_specs=[pl.BlockSpec((1, Ld, D), lambda b: (b, 0, 0)),
                  pl.BlockSpec((1, Le, D), lambda b: (b, 0, 0)),
                  # self-attn params + norm1
                  wspec((D, D)), wspec((1, D)),
                  wspec((D, 2 * D)), wspec((1, 2 * D)),
                  wspec((D, D)), wspec((1, D)),
                  wspec((1, D)), wspec((1, D)),
                  # cross-attn params + norm2
                  wspec((D, D)), wspec((1, D)),
                  wspec((D, 2 * D)), wspec((1, 2 * D)),
                  wspec((D, D)), wspec((1, D)),
                  wspec((1, D)), wspec((1, D))],
        out_specs=pl.BlockSpec((1, Ld, D), lambda b: (b, 0, 0)),
        compiler_params=pltpu.CompilerParams(dimension_semantics=("parallel",)),
    )(x, cross,
      p_self["wq"], p_self["bq"], p_self["wkv"], p_self["bkv"],
      p_self["wo"], p_self["bo"], p_ln1["g"], p_ln1["b"],
      p_cross["wq"], p_cross["bq"], p_cross["wkv"], p_cross["bkv"],
      p_cross["wo"], p_cross["bo"], p_ln2["g"], p_ln2["b"])


def pallas_ffn(x2d, p_ff1, p_ff2, p_ln, activation="gelu", final_ln=None):
    rows, D = x2d.shape
    dff = p_ff1["w"].shape[1]
    bm = _row_tile(rows)
    wspec = lambda shape: pl.BlockSpec(shape, lambda i: (0, 0))
    in_specs = [pl.BlockSpec((bm, D), lambda i: (i, 0)),
                wspec((D, dff)), wspec((1, dff)),
                wspec((dff, D)), wspec((1, D)),
                wspec((1, D)), wspec((1, D))]
    if final_ln is None:
        kernel = functools.partial(_ffn_kernel, activation=activation)
        args = (x2d, p_ff1["w"], p_ff1["b"], p_ff2["w"], p_ff2["b"],
                p_ln["g"], p_ln["b"])
    else:
        kernel = functools.partial(_ffn_final_ln_kernel, activation=activation)
        in_specs = in_specs + [wspec((1, D)), wspec((1, D))]
        args = (x2d, p_ff1["w"], p_ff1["b"], p_ff2["w"], p_ff2["b"],
                p_ln["g"], p_ln["b"], final_ln["g"], final_ln["b"])
    return pl.pallas_call(
        kernel,
        out_shape=jax.ShapeDtypeStruct((rows, D), F32),
        grid=(rows // bm,),
        in_specs=in_specs,
        out_specs=pl.BlockSpec((bm, D), lambda i: (i, 0)),
        compiler_params=pltpu.CompilerParams(dimension_semantics=("parallel",)),
    )(*args)


def pallas_distill(p, x):
    B, L, D = x.shape
    l_out = (L - 1) // 2 + 1
    wspec = lambda shape: pl.BlockSpec(shape, lambda b: (0, 0))
    return pl.pallas_call(
        functools.partial(_distill_kernel, l_out=l_out),
        out_shape=jax.ShapeDtypeStruct((B, l_out, D), F32),
        grid=(B,),
        in_specs=[pl.BlockSpec((1, L, D), lambda b: (b, 0, 0)),
                  wspec((D, D)), wspec((D, D)), wspec((D, D)), wspec((1, D))],
        out_specs=pl.BlockSpec((1, l_out, D), lambda b: (b, 0, 0)),
        compiler_params=pltpu.CompilerParams(dimension_semantics=("parallel",)),
    )(x, p["w0"], p["w1"], p["w2"], p["b"])


def pallas_layernorm(x2d, p):
    rows, D = x2d.shape
    bm = _row_tile(rows)
    return pl.pallas_call(
        _ln_kernel,
        out_shape=jax.ShapeDtypeStruct((rows, D), F32),
        grid=(rows // bm,),
        in_specs=[pl.BlockSpec((bm, D), lambda i: (i, 0)),
                  pl.BlockSpec((1, D), lambda i: (0, 0)),
                  pl.BlockSpec((1, D), lambda i: (0, 0))],
        out_specs=pl.BlockSpec((bm, D), lambda i: (i, 0)),
        compiler_params=pltpu.CompilerParams(dimension_semantics=("parallel",)),
    )(x2d, p["g"], p["b"])


def pallas_ln_proj(x2d, p_ln, p_proj):
    rows, D = x2d.shape
    c_out = p_proj["w"].shape[1]
    bm = _row_tile(rows)
    return pl.pallas_call(
        _ln_proj_kernel,
        out_shape=jax.ShapeDtypeStruct((rows, c_out), F32),
        grid=(rows // bm,),
        in_specs=[pl.BlockSpec((bm, D), lambda i: (i, 0)),
                  pl.BlockSpec((1, D), lambda i: (0, 0)),
                  pl.BlockSpec((1, D), lambda i: (0, 0)),
                  pl.BlockSpec((D, c_out), lambda i: (0, 0)),
                  pl.BlockSpec((1, c_out), lambda i: (0, 0))],
        out_specs=pl.BlockSpec((bm, c_out), lambda i: (i, 0)),
        compiler_params=pltpu.CompilerParams(dimension_semantics=("parallel",)),
    )(x2d, p_ln["g"], p_ln["b"], p_proj["w"], p_proj["b"])


# ----------------------------- model building blocks -------------------------


def encoder_layer(p, x, n_heads, final_ln=None):
    B, L, D = x.shape
    x = pallas_mha_block(x, x, p["attn"], p["norm1"], n_heads, causal=False)
    y = pallas_ffn(x.reshape(B * L, D), p["ff1"], p["ff2"], p["norm2"],
                   final_ln=final_ln)
    return y.reshape(B, L, D)


def decoder_layer(p, x, cross, n_heads):
    B, L, D = x.shape
    x = pallas_dec_attn(x, cross, p["self_attn"], p["cross_attn"],
                        p["norm1"], p["norm2"], n_heads)
    y = pallas_ffn(x.reshape(B * L, D), p["ff1"], p["ff2"], p["norm3"])
    return y.reshape(B, L, D)


def positional_encoding(max_len, d_model):
    pos = jnp.arange(max_len, dtype=F32)[:, None]
    div = jnp.exp(jnp.arange(0, d_model, 2, dtype=F32) *
                  (-math.log(10000.0) / d_model))
    pe = jnp.zeros((max_len, d_model), F32)
    pe = pe.at[:, 0::2].set(jnp.sin(pos * div))
    pe = pe.at[:, 1::2].set(jnp.cos(pos * div))
    return pe


# ------------------------------- parameter init ------------------------------


def _dense(key, din, dout, scale=0.02):
    return {"w": jax.random.normal(key, (din, dout), F32) * scale,
            "b": jnp.zeros((1, dout), F32)}


def _ln_p(d):
    return {"g": jnp.ones((1, d), F32), "b": jnp.zeros((1, d), F32)}


def _circ_conv(key, cin, cout):
    # torch Conv1d weight (cout, cin, 3) -> three (cin, cout) slices; fold eval-mode BN.
    w = jax.random.normal(key, (cout, cin, 3), F32) * 0.02
    s = 1.0 / math.sqrt(1.0 + 1e-5)   # BN: mean=0, var=1, gamma=1, beta=0
    return {"w0": w[:, :, 0].T * s, "w1": w[:, :, 1].T * s, "w2": w[:, :, 2].T * s,
            "b": jnp.zeros((1, cout), F32)}


def _attn_params(key, d):
    k1, k2, k3, k4 = jax.random.split(key, 4)
    wk = jax.random.normal(k2, (d, d), F32) * 0.02
    wv = jax.random.normal(k3, (d, d), F32) * 0.02
    return {"wq": jax.random.normal(k1, (d, d), F32) * 0.02,
            "bq": jnp.zeros((1, d), F32),
            "wkv": jnp.concatenate([wk, wv], axis=1),     # fused k/v projection
            "bkv": jnp.zeros((1, 2 * d), F32),
            "wo": jax.random.normal(k4, (d, d), F32) * 0.02,
            "bo": jnp.zeros((1, d), F32)}


def init_params(key, cfg):
    d, dff = cfg["d_model"], cfg["d_ff"]
    ks = jax.random.split(key, 32)
    p = {
        "pe": positional_encoding(5000, d),   # built once, sliced per forward
        "enc_emb": _circ_conv(ks[0], cfg["enc_in"], d),
        "dec_emb": _circ_conv(ks[1], cfg["dec_in"], d),
        "enc_norm": _ln_p(d),
        "dec_norm": _ln_p(d),
        "proj": _dense(ks[2], d, cfg["c_out"]),
    }
    p["enc_layers"] = []
    for i in range(cfg["e_layers"]):
        k = jax.random.split(ks[3 + i], 3)
        p["enc_layers"].append({"attn": _attn_params(k[0], d),
                                "norm1": _ln_p(d), "norm2": _ln_p(d),
                                "ff1": _dense(k[1], d, dff),
                                "ff2": _dense(k[2], dff, d)})
    p["enc_convs"] = [_circ_conv(ks[10 + i], d, d)
                      for i in range(cfg["e_layers"] - 1)]
    p["dec_layers"] = []
    for i in range(cfg["d_layers"]):
        k = jax.random.split(ks[20 + i], 4)
        p["dec_layers"].append({"self_attn": _attn_params(k[0], d),
                                "cross_attn": _attn_params(k[1], d),
                                "norm1": _ln_p(d), "norm2": _ln_p(d), "norm3": _ln_p(d),
                                "ff1": _dense(k[2], d, dff),
                                "ff2": _dense(k[3], dff, d)})
    return p


# ---------------------------------- forward ----------------------------------


def informer_forward(params, cfg, enc_inp, dec_inp):
    d, H = cfg["d_model"], cfg["n_heads"]
    pe = params["pe"]

    # ---- encoder ----
    x = pallas_embed(enc_inp, params["enc_emb"], pe[:enc_inp.shape[1]])
    n_enc = len(params["enc_layers"])
    if n_enc > 0:
        for i, lp in enumerate(params["enc_layers"]):
            is_last = i == n_enc - 1
            # fuse the encoder's final LayerNorm into the last layer's FFN kernel
            x = encoder_layer(lp, x, H,
                              final_ln=params["enc_norm"] if is_last else None)
            if i < len(params["enc_convs"]):
                x = pallas_distill(params["enc_convs"][i], x)
        enc_out = x
    else:
        B, Le, _ = x.shape
        enc_out = pallas_layernorm(
            x.reshape(B * Le, d), params["enc_norm"]).reshape(B, Le, d)

    # ---- decoder ----
    y = pallas_embed(dec_inp, params["dec_emb"], pe[:dec_inp.shape[1]])
    for lp in params["dec_layers"]:
        y = decoder_layer(lp, y, enc_out, H)
    # final LayerNorm + projection are per-position: apply only to the predicted tail
    y_tail = y[:, -cfg["pred_len"]:, :]
    Bt, Lt, _ = y_tail.shape
    out = pallas_ln_proj(y_tail.reshape(Bt * Lt, d), params["dec_norm"], params["proj"])
    return out.reshape(Bt, Lt, -1)


# ------------------------------------ main ------------------------------------


if __name__ == "__main__":
    cfg = dict(enc_in=4, dec_in=4, c_out=4, seq_len=16, label_len=8, pred_len=8,
               d_model=32, n_heads=4, e_layers=2, d_layers=1, d_ff=64)

    key = jax.random.PRNGKey(0)
    kp, ke, kd = jax.random.split(key, 3)
    params = init_params(kp, cfg)

    enc_inp = jax.random.normal(ke, (2, cfg["seq_len"], cfg["enc_in"]), F32)
    dec_inp = jax.random.normal(
        kd, (2, cfg["label_len"] + cfg["pred_len"], cfg["dec_in"]), F32)

    out = informer_forward(params, cfg, enc_inp, dec_inp)
    out = jax.block_until_ready(out)
    assert out.shape == (2, cfg["pred_len"], cfg["c_out"]), out.shape
    assert bool(jnp.all(jnp.isfinite(out)))
    print("KERNEL_OK")
</pallas_src>

<mosaic_0001>
module attributes {stable_mosaic.version = 11 : i64} {
  func.func @_embed_kernel(%arg0: i32, %arg1: memref<1x16x4xf32, #tpu.memory_space<vmem>>, %arg2: memref<4x32xf32, #tpu.memory_space<vmem>>, %arg3: memref<4x32xf32, #tpu.memory_space<vmem>>, %arg4: memref<4x32xf32, #tpu.memory_space<vmem>>, %arg5: memref<1x32xf32, #tpu.memory_space<vmem>>, %arg6: memref<16x32xf32, #tpu.memory_space<vmem>>, %arg7: memref<1x16x32xf32, #tpu.memory_space<vmem>>) attributes {dimension_semantics = [#tpu.dimension_semantics<parallel>], iteration_bounds = array<i64: 2>, scalar_prefetch = 0 : i64, scratch_operands = 0 : i64, tpu.core_type = #tpu.core_type<tc>, window_params = [{transform_indices = @transform_0, window_bounds = array<i64: 1, 16, 4>}, {pipeline_mode = #tpu.pipeline_mode<synchronous>, transform_indices = @transform_1, window_bounds = array<i64: 4, 32>}, {pipeline_mode = #tpu.pipeline_mode<synchronous>, transform_indices = @transform_2, window_bounds = array<i64: 4, 32>}, {pipeline_mode = #tpu.pipeline_mode<synchronous>, transform_indices = @transform_3, window_bounds = array<i64: 4, 32>}, {pipeline_mode = #tpu.pipeline_mode<synchronous>, transform_indices = @transform_4, window_bounds = array<i64: 1, 32>}, {pipeline_mode = #tpu.pipeline_mode<synchronous>, transform_indices = @transform_5, window_bounds = array<i64: 16, 32>}, {transform_indices = @transform_6, window_bounds = array<i64: 1, 16, 32>}]} {
    %c0 = arith.constant 0 : index
    %c0_0 = arith.constant 0 : index
    %c0_1 = arith.constant 0 : index
    %0 = vector.load %arg1[%c0, %c0_0, %c0_1] : memref<1x16x4xf32, #tpu.memory_space<vmem>>, vector<1x16x4xf32>
    %1 = vector.shape_cast %0 : vector<1x16x4xf32> to vector<16x4xf32>
    %2 = vector.extract_strided_slice %1 {offsets = [15, 0], sizes = [1, 4], strides = [1, 1]} : vector<16x4xf32> to vector<1x4xf32>
    %3 = vector.extract_strided_slice %1 {offsets = [0, 0], sizes = [15, 4], strides = [1, 1]} : vector<16x4xf32> to vector<15x4xf32>
    %4 = tpu.concatenate %2, %3 in 0 : vector<1x4xf32>, vector<15x4xf32> -> vector<16x4xf32>
    %c0_2 = arith.constant 0 : index
    %c0_3 = arith.constant 0 : index
    %5 = vector.load %arg2[%c0_2, %c0_3] : memref<4x32xf32, #tpu.memory_space<vmem>>, vector<4x32xf32>
    %6 = arith.truncf %4 : vector<16x4xf32> to vector<16x4xbf16>
    %7 = arith.truncf %5 : vector<4x32xf32> to vector<4x32xbf16>
    %cst = arith.constant dense<0.000000e+00> : vector<16x32xf32>
    %8 = tpu.matmul %6, %7, %cst {dimension_numbers = #tpu.dot_dimension_numbers<[1], [0], [0], [1], [0, 0, 1, 1], [], []>} : vector<16x4xbf16>, vector<4x32xbf16>, vector<16x32xf32> -> vector<16x32xf32>
    %c0_4 = arith.constant 0 : index
    %c0_5 = arith.constant 0 : index
    %9 = vector.load %arg3[%c0_4, %c0_5] : memref<4x32xf32, #tpu.memory_space<vmem>>, vector<4x32xf32>
    %10 = arith.truncf %1 : vector<16x4xf32> to vector<16x4xbf16>
    %11 = arith.truncf %9 : vector<4x32xf32> to vector<4x32xbf16>
    %cst_6 = arith.constant dense<0.000000e+00> : vector<16x32xf32>
    %12 = tpu.matmul %10, %11, %cst_6 {dimension_numbers = #tpu.dot_dimension_numbers<[1], [0], [0], [1], [0, 0, 1, 1], [], []>} : vector<16x4xbf16>, vector<4x32xbf16>, vector<16x32xf32> -> vector<16x32xf32>
    %13 = arith.addf %8, %12 : vector<16x32xf32>
    %14 = vector.extract_strided_slice %1 {offsets = [1, 0], sizes = [15, 4], strides = [1, 1]} : vector<16x4xf32> to vector<15x4xf32>
    %15 = vector.extract_strided_slice %1 {offsets = [0, 0], sizes = [1, 4], strides = [1, 1]} : vector<16x4xf32> to vector<1x4xf32>
    %16 = tpu.concatenate %14, %15 in 0 : vector<15x4xf32>, vector<1x4xf32> -> vector<16x4xf32>
    %c0_7 = arith.constant 0 : index
    %c0_8 = arith.constant 0 : index
    %17 = vector.load %arg4[%c0_7, %c0_8] : memref<4x32xf32, #tpu.memory_space<vmem>>, vector<4x32xf32>
    %18 = arith.truncf %16 : vector<16x4xf32> to vector<16x4xbf16>
    %19 = arith.truncf %17 : vector<4x32xf32> to vector<4x32xbf16>
    %cst_9 = arith.constant dense<0.000000e+00> : vector<16x32xf32>
    %20 = tpu.matmul %18, %19, %cst_9 {dimension_numbers = #tpu.dot_dimension_numbers<[1], [0], [0], [1], [0, 0, 1, 1], [], []>} : vector<16x4xbf16>, vector<4x32xbf16>, vector<16x32xf32> -> vector<16x32xf32>
    %21 = arith.addf %13, %20 : vector<16x32xf32>
    %c0_10 = arith.constant 0 : index
    %c0_11 = arith.constant 0 : index
    %22 = vector.load %arg5[%c0_10, %c0_11] : memref<1x32xf32, #tpu.memory_space<vmem>>, vector<1x32xf32>
    %23 = vector.broadcast %22 : vector<1x32xf32> to vector<16x32xf32>
    %24 = arith.addf %21, %23 : vector<16x32xf32>
    %c0_12 = arith.constant 0 : index
    %c0_13 = arith.constant 0 : index
    %25 = vector.load %arg6[%c0_12, %c0_13] : memref<16x32xf32, #tpu.memory_space<vmem>>, vector<16x32xf32>
    %26 = arith.addf %24, %25 : vector<16x32xf32>
    %c0_14 = arith.constant 0 : index
    %c0_15 = arith.constant 0 : index
    %c0_16 = arith.constant 0 : index
    %27 = vector.load %arg7[%c0_14, %c0_15, %c0_16] : memref<1x16x32xf32, #tpu.memory_space<vmem>>, vector<1x16x32xf32>
    %28 = vector.shape_cast %27 : vector<1x16x32xf32> to vector<16x32xf32>
    %29 = vector.shape_cast %26 : vector<16x32xf32> to vector<1x16x32xf32>
    tpu.vector_store %arg7[%c0_14, %c0_15, %c0_16], %29 {strides = array<i32>} : memref<1x16x32xf32, #tpu.memory_space<vmem>>, vector<1x16x32xf32>,
    return
  }
  func.func @transform_0(%arg0: i32) -> (i32, i32, i32) {
    %c0_i32 = arith.constant 0 : i32
    %c0_i32_0 = arith.constant 0 : i32
    %c0_i32_1 = arith.constant 0 : i32
    return %arg0, %c0_i32, %c0_i32_0 : i32, i32, i32
  }
  func.func @transform_1(%arg0: i32) -> (i32, i32) {
    %c0_i32 = arith.constant 0 : i32
    %c0_i32_0 = arith.constant 0 : i32
    %c0_i32_1 = arith.constant 0 : i32
    return %c0_i32, %c0_i32_0 : i32, i32
  }
  func.func @transform_2(%arg0: i32) -> (i32, i32) {
    %c0_i32 = arith.constant 0 : i32
    %c0_i32_0 = arith.constant 0 : i32
    %c0_i32_1 = arith.constant 0 : i32
    return %c0_i32, %c0_i32_0 : i32, i32
  }
  func.func @transform_3(%arg0: i32) -> (i32, i32) {
    %c0_i32 = arith.constant 0 : i32
    %c0_i32_0 = arith.constant 0 : i32
    %c0_i32_1 = arith.constant 0 : i32
    return %c0_i32, %c0_i32_0 : i32, i32
  }
  func.func @transform_4(%arg0: i32) -> (i32, i32) {
    %c0_i32 = arith.constant 0 : i32
    %c0_i32_0 = arith.constant 0 : i32
    %c0_i32_1 = arith.constant 0 : i32
    return %c0_i32, %c0_i32_0 : i32, i32
  }
  func.func @transform_5(%arg0: i32) -> (i32, i32) {
    %c0_i32 = arith.constant 0 : i32
    %c0_i32_0 = arith.constant 0 : i32
    %c0_i32_1 = arith.constant 0 : i32
    return %c0_i32, %c0_i32_0 : i32, i32
  }
  func.func @transform_6(%arg0: i32) -> (i32, i32, i32) {
    %c0_i32 = arith.constant 0 : i32
    %c0_i32_0 = arith.constant 0 : i32
    %c0_i32_1 = arith.constant 0 : i32
    return %arg0, %c0_i32, %c0_i32_0 : i32, i32, i32
  }
}

</mosaic_0001>

<llo_original>
// kernel: tpu_custom_call.1
$region0: #{tpu_custom_call.1}
  #allocation0 [shape = 'u32[]', space=smem, size = 0x4, offset = 0x4, fixed_abs, tag = 'smem constant byte address 0x4 - core index']
  #allocation1 [shape = 'u32[144,128]{1,0:T(1,128)}', space=vmem, size = 0x12000, scoped, tag = 'internal scratch']
  %s0 = inlined_call_operand.vmem [shape: f32[2,16,4], index: 0, kind: input, shape index: {}]
  %s1 = inlined_call_operand.vmem [shape: f32[4,32], index: 1, kind: input, shape index: {}]
  %s2 = inlined_call_operand.vmem [shape: f32[4,32], index: 2, kind: input, shape index: {}]
  %s3 = inlined_call_operand.vmem [shape: f32[4,32], index: 3, kind: input, shape index: {}]
  %s4 = inlined_call_operand.vmem [shape: f32[1,32], index: 4, kind: input, shape index: {}]
  %s5 = inlined_call_operand.vmem [shape: f32[16,32], index: 5, kind: input, shape index: {}]
  %s6 = inlined_call_operand.hbm [shape: f32[2,16,32], index: 6, kind: output, shape index: {}]
  %s7 = sld [smem:[#allocation0]]
  $region57: #{tpu_custom_call.1} parent=0
    _
  %s9 = ssub.s32 1, %s7
  %s10 = scalar_select 0, %s9, %s7
  $region1: #{tpu_custom_call.1} parent=0
    #allocation2 [shape = 'u8[16384]{0}', space=vmem, size = 0x4000, scoped, tag = 'output window, operand 0']
    #allocation3 [shape = 's32[2]{0}', space=sflag, size = 0x8, scoped, tag = 'scoped memory for tpu_custom_call.1']
    %11 = vsyncpa [#allocation3], 0
    %s12 = scalar_lea.sflag [#allocation3], 1
    %13 = vsyncpa %s12, 0
    loop: start=0, step=1, limit=4
    $region2: #{tpu_custom_call.1} parent=1 // loop_pre_header
      _
    $region3: #{tpu_custom_call.1} parent=1 // loop_header
      %s15 = sphi 0, %s19
      %p16 = scmp.ge.s32.totalorder %s15, 4
      %s25 = sphi 0, %s27
      %s28 = sphi 0, %s25
      %s29 = sphi 0, %s28
      %s45 = sphi 0, %s29
      %s49 = sphi 0, %s49
      %s51 = sphi 0, %s49
      %s52 = sphi 0, %s51
      %s66 = sphi 0, %s52
      %s70 = sphi 0, %s70
      %s72 = sphi 0, %s70
      %s73 = sphi 0, %s72
      %s87 = sphi 0, %s73
      %s91 = sphi 0, %s91
      %s93 = sphi 0, %s91
      %s94 = sphi 0, %s93
      %s108 = sphi 0, %s94
      %s112 = sphi 0, %s112
      %s114 = sphi 0, %s112
      %s115 = sphi 0, %s114
      %s129 = sphi 0, %s115
      %s133 = sphi 0, %s133
      %s135 = sphi 0, %s133
      %s136 = sphi 0, %s135
      %s150 = sphi 0, %s136
      %s156 = sphi 0, %s158
      %s159 = sphi 0, %s156
      %s160 = sphi 0, %s159
      %s176 = sphi 0, %s160
    $region4: #{tpu_custom_call.1} parent=1 // loop_header_branch
      %18 = sbr.rel (%p16) target = $region8
    $region5: #{tpu_custom_call.1} parent=1 // loop_body
      %s20 = ssub.s32 %s15, 1
      %s21 = ssub.s32 %s15, 2
      %s22 = sadd.s32 %s15, 1
      %s23 = ssub.s32 %s15, %s22
      %p24 = scmp.eq.s32.totalorder %s23, 0
      %s26 = sadd.s32 %s25, 1
      %s27 = scalar_select %p24, %s25, %s26
      %p30 = pneg %p24
      %p31 = scmp.eq.s32.totalorder %s15, 1
      %p32 = por %p30, %p31
      %p33 = scmp.ne.s32.totalorder %s25, %s28
      %p34 = scmp.eq.s32.totalorder %s15, 0
      %p35 = por %p33, %p34
      %p36 = scmp.ne.s32.totalorder %s25, %s28
      %p37 = scmp.eq.s32.totalorder %s20, 1
      %p38 = por %p36, %p37
      %p39 = scmp.ne.s32.totalorder %s28, %s29
      %p40 = scmp.eq.s32.totalorder %s20, 0
      %p41 = por %p39, %p40
      %p42 = scmp.ne.s32.totalorder %s28, %s29
      %p43 = scmp.eq.s32.totalorder %s21, 1
      %p44 = por %p42, %p43
      %p46 = scmp.ne.s32.totalorder %s29, %s45
      %p47 = scmp.eq.s32.totalorder %s21, 0
      %p48 = por %p46, %p47
      %s50 = sadd.s32 %s49, 1
      %p53 = scmp.eq.s32.totalorder %s15, 1
      %p54 = scmp.ne.s32.totalorder %s49, %s51
      %p55 = scmp.eq.s32.totalorder %s15, 0
      %p56 = por %p54, %p55
      %p57 = scmp.ne.s32.totalorder %s49, %s51
      %p58 = scmp.eq.s32.totalorder %s20, 1
      %p59 = por %p57, %p58
      %p60 = scmp.ne.s32.totalorder %s51, %s52
      %p61 = scmp.eq.s32.totalorder %s20, 0
      %p62 = por %p60, %p61
      %p63 = scmp.ne.s32.totalorder %s51, %s52
      %p64 = scmp.eq.s32.totalorder %s21, 1
      %p65 = por %p63, %p64
      %p67 = scmp.ne.s32.totalorder %s52, %s66
      %p68 = scmp.eq.s32.totalorder %s21, 0
      %p69 = por %p67, %p68
      %s71 = sadd.s32 %s70, 1
      %p74 = scmp.eq.s32.totalorder %s15, 1
      %p75 = scmp.ne.s32.totalorder %s70, %s72
      %p76 = scmp.eq.s32.totalorder %s15, 0
      %p77 = por %p75, %p76
      %p78 = scmp.ne.s32.totalorder %s70, %s72
      %p79 = scmp.eq.s32.totalorder %s20, 1
      %p80 = por %p78, %p79
      %p81 = scmp.ne.s32.totalorder %s72, %s73
      %p82 = scmp.eq.s32.totalorder %s20, 0
      %p83 = por %p81, %p82
      %p84 = scmp.ne.s32.totalorder %s72, %s73
      %p85 = scmp.eq.s32.totalorder %s21, 1
      %p86 = por %p84, %p85
      %p88 = scmp.ne.s32.totalorder %s73, %s87
      %p89 = scmp.eq.s32.totalorder %s21, 0
      %p90 = por %p88, %p89
      %s92 = sadd.s32 %s91, 1
      %p95 = scmp.eq.s32.totalorder %s15, 1
      %p96 = scmp.ne.s32.totalorder %s91, %s93
      %p97 = scmp.eq.s32.totalorder %s15, 0
      %p98 = por %p96, %p97
      %p99 = scmp.ne.s32.totalorder %s91, %s93
      %p100 = scmp.eq.s32.totalorder %s20, 1
      %p101 = por %p99, %p100
      %p102 = scmp.ne.s32.totalorder %s93, %s94
      %p103 = scmp.eq.s32.totalorder %s20, 0
      %p104 = por %p102, %p103
      %p105 = scmp.ne.s32.totalorder %s93, %s94
      %p106 = scmp.eq.s32.totalorder %s21, 1
      %p107 = por %p105, %p106
      %p109 = scmp.ne.s32.totalorder %s94, %s108
      %p110 = scmp.eq.s32.totalorder %s21, 0
      %p111 = por %p109, %p110
      %s113 = sadd.s32 %s112, 1
      %p116 = scmp.eq.s32.totalorder %s15, 1
      %p117 = scmp.ne.s32.totalorder %s112, %s114
      %p118 = scmp.eq.s32.totalorder %s15, 0
      %p119 = por %p117, %p118
      %p120 = scmp.ne.s32.totalorder %s112, %s114
      %p121 = scmp.eq.s32.totalorder %s20, 1
      %p122 = por %p120, %p121
      %p123 = scmp.ne.s32.totalorder %s114, %s115
      %p124 = scmp.eq.s32.totalorder %s20, 0
      %p125 = por %p123, %p124
      %p126 = scmp.ne.s32.totalorder %s114, %s115
      %p127 = scmp.eq.s32.totalorder %s21, 1
      %p128 = por %p126, %p127
      %p130 = scmp.ne.s32.totalorder %s115, %s129
      %p131 = scmp.eq.s32.totalorder %s21, 0
      %p132 = por %p130, %p131
      %s134 = sadd.s32 %s133, 1
      %p137 = scmp.eq.s32.totalorder %s15, 1
      %p138 = scmp.ne.s32.totalorder %s133, %s135
      %p139 = scmp.eq.s32.totalorder %s15, 0
      %p140 = por %p138, %p139
      %p141 = scmp.ne.s32.totalorder %s133, %s135
      %p142 = scmp.eq.s32.totalorder %s20, 1
      %p143 = por %p141, %p142
      %p144 = scmp.ne.s32.totalorder %s135, %s136
      %p145 = scmp.eq.s32.totalorder %s20, 0
      %p146 = por %p144, %p145
      %p147 = scmp.ne.s32.totalorder %s135, %s136
      %p148 = scmp.eq.s32.totalorder %s21, 1
      %p149 = por %p147, %p148
      %p151 = scmp.ne.s32.totalorder %s136, %s150
      %p152 = scmp.eq.s32.totalorder %s21, 0
      %p153 = por %p151, %p152
      %s154 = ssub.s32 %s15, %s22
      %p155 = scmp.eq.s32.totalorder %s154, 0
      %s157 = sadd.s32 %s156, 1
      %s158 = scalar_select %p155, %s156, %s157
      %p161 = pneg %p155
      %p162 = scmp.eq.s32.totalorder %s15, 1
      %p163 = por %p161, %p162
      %p164 = scmp.ne.s32.totalorder %s156, %s159
      %p165 = scmp.eq.s32.totalorder %s15, 0
      %p166 = por %p164, %p165
      %p167 = scmp.ne.s32.totalorder %s156, %s159
      %p168 = scmp.eq.s32.totalorder %s20, 1
      %p169 = por %p167, %p168
      %p170 = scmp.ne.s32.totalorder %s159, %s160
      %p171 = scmp.eq.s32.totalorder %s20, 0
      %p172 = por %p170, %p171
      %p173 = scmp.ne.s32.totalorder %s159, %s160
      %p174 = scmp.eq.s32.totalorder %s21, 1
      %p175 = por %p173, %p174
      %p177 = scmp.ne.s32.totalorder %s160, %s176
      %p178 = scmp.eq.s32.totalorder %s21, 0
      %p179 = por %p177, %p178
      %p180 = scmp.le.s32.totalorder 1, %s15
      %p181 = scmp.lt.s32.totalorder %s15, 3
      %p182 = pnand %p180, %p181
      %p183 = pneg %p182
      // Predicated region
      $region9: #{tpu_custom_call.1} parent=5 // pred_check
        _
      $region10: #{tpu_custom_call.1} parent=5 // pred_check_branch
        %185 = sbr.rel (%p182) target = $region12
      $region11: #{tpu_custom_call.1} parent=5 // pred_region
        %s186 = ssub.s32 %s15, 1
        // Predicated region
        $region13: #{tpu_custom_call.1} parent=11 // pred_check
          %p187 = pneg %p62
        $region14: #{tpu_custom_call.1} parent=11 // pred_check_branch
          %189 = sbr.rel (%p187) target = $region16
        $region15: #{tpu_custom_call.1} parent=11 // pred_region
          _
        $region16: #{tpu_custom_call.1} parent=11 // pred_fallthru
          _
        // Predicated region
        $region17: #{tpu_custom_call.1} parent=11 // pred_check
          %p190 = pneg %p83
        $region18: #{tpu_custom_call.1} parent=11 // pred_check_branch
          %192 = sbr.rel (%p190) target = $region20
        $region19: #{tpu_custom_call.1} parent=11 // pred_region
          _
        $region20: #{tpu_custom_call.1} parent=11 // pred_fallthru
          _
        // Predicated region
        $region21: #{tpu_custom_call.1} parent=11 // pred_check
          %p193 = pneg %p104
        $region22: #{tpu_custom_call.1} parent=11 // pred_check_branch
          %195 = sbr.rel (%p193) target = $region24
        $region23: #{tpu_custom_call.1} parent=11 // pred_region
          _
        $region24: #{tpu_custom_call.1} parent=11 // pred_fallthru
          _
        // Predicated region
        $region25: #{tpu_custom_call.1} parent=11 // pred_check
          %p196 = pneg %p125
        $region26: #{tpu_custom_call.1} parent=11 // pred_check_branch
          %198 = sbr.rel (%p196) target = $region28
        $region27: #{tpu_custom_call.1} parent=11 // pred_region
          _
        $region28: #{tpu_custom_call.1} parent=11 // pred_fallthru
          _
        // Predicated region
        $region29: #{tpu_custom_call.1} parent=11 // pred_check
          %p199 = pneg %p146
        $region30: #{tpu_custom_call.1} parent=11 // pred_check_branch
          %201 = sbr.rel (%p199) target = $region32
        $region31: #{tpu_custom_call.1} parent=11 // pred_region
          _
        $region32: #{tpu_custom_call.1} parent=11 // pred_fallthru
          _
      $region12: #{tpu_custom_call.1} parent=5 // pred_fallthru
        _
      %p202 = scmp.lt.s32.totalorder %s15, 2
      // Predicated region
      $region33: #{tpu_custom_call.1} parent=5 // pred_check
        %p203 = pneg %p202
      $region34: #{tpu_custom_call.1} parent=5 // pred_check_branch
        %205 = sbr.rel (%p203) target = $region36
      $region35: #{tpu_custom_call.1} parent=5 // pred_region
        // Predicated region
        $region37: #{tpu_custom_call.1} parent=35 // pred_check
          %p206 = pneg %p35
        $region38: #{tpu_custom_call.1} parent=35 // pred_check_branch
          %208 = sbr.rel (%p206) target = $region40
        $region39: #{tpu_custom_call.1} parent=35 // pred_region
          %p209 = scmp.lt.s32.totalorder %s15, 1
          %s210 = scalar_select %p209, %s15, 1
          %s211 = smul.addr %s210, 2
          %s212 = smul.addr %s211, 8
          %s213 = scalar_lea.vmem %s0, %s212
        $region40: #{tpu_custom_call.1} parent=35 // pred_fallthru
          _
      $region36: #{tpu_custom_call.1} parent=5 // pred_fallthru
        _
      %p214 = scmp.le.s32.totalorder 1, %s15
      %p215 = scmp.lt.s32.totalorder %s15, 3
      %p216 = pnand %p214, %p215
      %p217 = pneg %p216
      // Predicated region
      $region41: #{tpu_custom_call.1} parent=5 // pred_check
        _
      $region42: #{tpu_custom_call.1} parent=5 // pred_check_branch
        %219 = sbr.rel (%p216) target = $region44
      $region43: #{tpu_custom_call.1} parent=5 // pred_region
        %s220 = ssub.s32 %s15, 1
        %p221 = scmp.lt.s32.totalorder %s20, 1
        %s222 = scalar_select %p221, %s20, 1
        %s223 = smul.addr %s222, 2
        %s224 = smul.addr %s223, 8
        %s225 = scalar_lea.vmem %s0, %s224
        %p226 = pneg %p41
        %p227 = pneg %p38
        %p228 = pneg %p62
        %p229 = pneg %p59
        %p230 = pneg %p83
        %p231 = pneg %p80
        %p232 = pneg %p104
        %p233 = pneg %p101
        %p234 = pneg %p125
        %p235 = pneg %p122
        %p236 = pneg %p146
        %p237 = pneg %p143
        %p238 = pneg %p172
        %p239 = pneg %p169
        %s240 = sand.u32 %s159, 1
        %s241 = scalar_lea.sflag [#allocation3], %s240
        %s242 = sand.u32 %s159, 1
        %s243 = smul.addr %s242, 16
        %s244 = scalar_lea.vmem [#allocation2], %s243
        %p245 = scmp.lt.s32.totalorder %s20, 1
        %s246 = scalar_select %p245, %s20, 1
        %s247 = smul.addr %s246, 2
        %s248 = smul.addr %s247, 8
        %s249 = scalar_lea.vmem %s0, %s248
        %v251 = vld [vmem:[%s249] sm:$0xff]
        %v252 = vld [vmem:[%s249 + $0x8] sm:$0xff]
        %v254 = vrot.slane %v252, 7
        %vm257 = vcmask 1040384
        %v258 = vrot.slane %v251, 7
        %v259 = vsel %vm257, %v258, %v254
        %v262 = vsel %vm257, %v254, %v258
        %v263 = vld [vmem:[%s1] sm:$0xf]
        %v264 = vpack.c.bf16 %v259, %v262
        %v265 = vpack.c.bf16 %v263, %v263
        %v266 = vld [vmem:[%s2] sm:$0xf]
        %v267 = vpack.c.bf16 %v252, %v251
        %v268 = vpack.c.bf16 %v266, %v266
        %vm269 = vcmask 31744
        %v271 = vsel %vm269, %v267, 0
        %vm273 = vcmask 1041408
        %v275 = vsel %vm273, %v268, 0
        %277 = vmatprep.subr.bf16.mxu0 0
        %278 = vmatpush1.bf16.msra.mxu0 %v275
        %279 = vmatprep.subr.bf16.mxu0 0
        %280 = vmatpush1.bf16.msra.mxu0 0
        %281 = vmatprep.subr.bf16.mxu0 0
        %282 = vmatpush1.bf16.msra.mxu0 0
        %283 = vmatprep.subr.bf16.mxu0 0
        %284 = vmatpush1.bf16.msra.mxu0 0
        %285 = vmatprep.subr.bf16.mxu0 0
        %286 = vmatpush1.bf16.msra.mxu0 0
        %287 = vmatprep.subr.bf16.mxu0 0
        %288 = vmatpush1.bf16.msra.mxu0 0
        %289 = vmatprep.subr.bf16.mxu0 0
        %290 = vmatpush1.bf16.msra.mxu0 0
        %291 = vmatprep.subr.bf16.mxu0 0
        %292 = vmatpush1.bf16.msra.mxu0 0
        %293 = vmatprep.subr.bf16.mxu0 0
        %294 = vmatpush1.bf16.msra.mxu0 0
        %295 = vmatprep.subr.bf16.mxu0 0
        %296 = vmatpush1.bf16.msra.mxu0 0
        %297 = vmatprep.subr.bf16.mxu0 0
        %298 = vmatpush1.bf16.msra.mxu0 0
        %299 = vmatprep.subr.bf16.mxu0 0
        %300 = vmatpush1.bf16.msra.mxu0 0
        %301 = vmatprep.subr.bf16.mxu0 0
        %302 = vmatpush1.bf16.msra.mxu0 0
        %303 = vmatprep.subr.bf16.mxu0 0
        %304 = vmatpush1.bf16.msra.mxu0 0
        %305 = vmatprep.subr.bf16.mxu0 0
        %306 = vmatpush1.bf16.msra.mxu0 0
        %307 = vmatprep.subr.bf16.mxu0 0
        %308 = vmatpush1.bf16.msra.mxu0 0
        %309 = vmatprep.mubr.bf16.mxu0 0
        %310 = vmatmul.mubr.bf16.gmra.mrb[0].mxu0 %v271
        %v311 = vpop.f32.mrb[0].mxu0
        %v312 = vadd.f32 0.0, %v311
        %v313 = vpop.f32.mrb[0].mxu0
        %v314 = vpop.f32.mrb[0].mxu0
        %v315 = vadd.f32 0.0, %v314
        %v316 = vpop.f32.mrb[0].mxu0
        %317 = vdwg.mxu0
        %v319 = vsel %vm269, %v264, 0
        %v322 = vsel %vm273, %v265, 0
        %324 = vmatprep.subr.bf16.mxu0 0
        %325 = vmatpush1.bf16.msra.mxu0 %v322
        %326 = vmatprep.subr.bf16.mxu0 0
        %327 = vmatpush1.bf16.msra.mxu0 0
        %328 = vmatprep.subr.bf16.mxu0 0
        %329 = vmatpush1.bf16.msra.mxu0 0
        %330 = vmatprep.subr.bf16.mxu0 0
        %331 = vmatpush1.bf16.msra.mxu0 0
        %332 = vmatprep.subr.bf16.mxu0 0
        %333 = vmatpush1.bf16.msra.mxu0 0
        %334 = vmatprep.subr.bf16.mxu0 0
        %335 = vmatpush1.bf16.msra.mxu0 0
        %336 = vmatprep.subr.bf16.mxu0 0
        %337 = vmatpush1.bf16.msra.mxu0 0
        %338 = vmatprep.subr.bf16.mxu0 0
        %339 = vmatpush1.bf16.msra.mxu0 0
        %340 = vmatprep.subr.bf16.mxu0 0
        %341 = vmatpush1.bf16.msra.mxu0 0
        %342 = vmatprep.subr.bf16.mxu0 0
        %343 = vmatpush1.bf16.msra.mxu0 0
        %344 = vmatprep.subr.bf16.mxu0 0
        %345 = vmatpush1.bf16.msra.mxu0 0
        %346 = vmatprep.subr.bf16.mxu0 0
        %347 = vmatpush1.bf16.msra.mxu0 0
        %348 = vmatprep.subr.bf16.mxu0 0
        %349 = vmatpush1.bf16.msra.mxu0 0
        %350 = vmatprep.subr.bf16.mxu0 0
        %351 = vmatpush1.bf16.msra.mxu0 0
        %352 = vmatprep.subr.bf16.mxu0 0
        %353 = vmatpush1.bf16.msra.mxu0 0
        %354 = vmatprep.subr.bf16.mxu0 0
        %355 = vmatpush1.bf16.msra.mxu0 0
        %356 = vmatprep.mubr.bf16.mxu0 0
        %357 = vmatmul.mubr.bf16.gmra.mrb[0].mxu0 %v319
        %v358 = vpop.f32.mrb[0].mxu0
        %v359 = vadd.f32 %v312, %v358
        %v360 = vpop.f32.mrb[0].mxu0
        %v361 = vpop.f32.mrb[0].mxu0
        %v362 = vadd.f32 %v315, %v361
        %v363 = vpop.f32.mrb[0].mxu0
        %364 = vdwg.mxu0
        %vm365 = vcmask 1046528
        %v366 = vrot.slane %v251, 1
        %v367 = vrot.slane %v252, 1
        %v368 = vsel %vm365, %v366, %v367
        %v372 = vsel %vm365, %v367, %v366
        %v373 = vld [vmem:[%s3] sm:$0xf]
        %v374 = vpack.c.bf16 %v372, %v368
        %v375 = vpack.c.bf16 %v373, %v373
        %v377 = vsel %vm269, %v374, 0
        %v380 = vsel %vm273, %v375, 0
        %382 = vmatprep.subr.bf16.mxu0 0
        %383 = vmatpush1.bf16.msra.mxu0 %v380
        %384 = vmatprep.subr.bf16.mxu0 0
        %385 = vmatpush1.bf16.msra.mxu0 0
        %386 = vmatprep.subr.bf16.mxu0 0
        %387 = vmatpush1.bf16.msra.mxu0 0
        %388 = vmatprep.subr.bf16.mxu0 0
        %389 = vmatpush1.bf16.msra.mxu0 0
        %390 = vmatprep.subr.bf16.mxu0 0
        %391 = vmatpush1.bf16.msra.mxu0 0
        %392 = vmatprep.subr.bf16.mxu0 0
        %393 = vmatpush1.bf16.msra.mxu0 0
        %394 = vmatprep.subr.bf16.mxu0 0
        %395 = vmatpush1.bf16.msra.mxu0 0
        %396 = vmatprep.subr.bf16.mxu0 0
        %397 = vmatpush1.bf16.msra.mxu0 0
        %398 = vmatprep.subr.bf16.mxu0 0
        %399 = vmatpush1.bf16.msra.mxu0 0
        %400 = vmatprep.subr.bf16.mxu0 0
        %401 = vmatpush1.bf16.msra.mxu0 0
        %402 = vmatprep.subr.bf16.mxu0 0
        %403 = vmatpush1.bf16.msra.mxu0 0
        %404 = vmatprep.subr.bf16.mxu0 0
        %405 = vmatpush1.bf16.msra.mxu0 0
        %406 = vmatprep.subr.bf16.mxu0 0
        %407 = vmatpush1.bf16.msra.mxu0 0
        %408 = vmatprep.subr.bf16.mxu0 0
        %409 = vmatpush1.bf16.msra.mxu0 0
        %410 = vmatprep.subr.bf16.mxu0 0
        %411 = vmatpush1.bf16.msra.mxu0 0
        %412 = vmatprep.subr.bf16.mxu0 0
        %413 = vmatpush1.bf16.msra.mxu0 0
        %414 = vmatprep.mubr.bf16.mxu0 0
        %415 = vmatmul.mubr.bf16.gmra.mrb[0].mxu0 %v377
        %v416 = vpop.f32.mrb[0].mxu0
        %v417 = vadd.f32 0.0, %v416
        %v418 = vpop.f32.mrb[0].mxu0
        %v419 = vpop.f32.mrb[0].mxu0
        %v420 = vadd.f32 0.0, %v419
        %v421 = vpop.f32.mrb[0].mxu0
        %422 = vdwg.mxu0
        %v423 = vadd.f32 %v359, %v417
        %v424 = vadd.f32 %v362, %v420
        %v425 = vld [vmem:[%s4] sm:$0x1]
        %v427 = vlaneseq
        %v428 = vshrl.u32 %v427, 7
        %v429 = vsub.s32 0, %v428
        %v430 = vrot.slane %v425, %v429
        %v432 = vadd.f32 %v423, %v430
        %v433 = vadd.f32 %v424, %v430
        %v434 = vld [vmem:[%s5] sm:$0xff]
        %v435 = vld [vmem:[%s5 + $0x8] sm:$0xff]
        %v436 = vadd.f32 %v432, %v434
        %v437 = vadd.f32 %v433, %v435
        %vm438 = vcmask 261120
        %439 = vst.msk [vmem:[%s244] sm:$0xff] %vm438, %v436
        %440 = vst.msk [vmem:[%s244 + $0x8] sm:$0xff] %vm438, %v437
        %s441 = sand.u32 %s159, 1
        %s442 = scalar_lea.sflag [#allocation3], %s441
        %s443 = sand.u32 %s159, 1
        %s444 = smul.addr %s443, 16
        %s445 = scalar_lea.vmem [#allocation2], %s444
        // Predicated region
        $region45: #{tpu_custom_call.1} parent=43 // pred_check
          %p446 = pneg %p169
        $region46: #{tpu_custom_call.1} parent=43 // pred_check_branch
          %448 = sbr.rel (%p446) target = $region48
        $region47: #{tpu_custom_call.1} parent=43 // pred_region
          %s450 = ssub.s32 256, 256
          %451 = vsyncadd %s442, %s450
          %s452 = smul.addr %s20, 2
          %s453 = smul.addr %s452, 128
          %s454 = scalar_lea.hbm %s6, %s453
          %s455 = sshll.u32 %s445, 4
          %s456 = int_to_ptr.vmem [resolvable:$true] %s455
          %461 = dma.vmem_to_hbm [thread:$0]  %s456, 256, %s454, %s442, 128, 128, 8
        $region48: #{tpu_custom_call.1} parent=43 // pred_fallthru
          _
      $region44: #{tpu_custom_call.1} parent=5 // pred_fallthru
        _
      %p462 = scmp.le.s32.totalorder 2, %s15
      // Predicated region
      $region49: #{tpu_custom_call.1} parent=5 // pred_check
        %p463 = pneg %p462
      $region50: #{tpu_custom_call.1} parent=5 // pred_check_branch
        %465 = sbr.rel (%p463) target = $region52
      $region51: #{tpu_custom_call.1} parent=5 // pred_region
        %s466 = ssub.s32 %s15, 2
        // Predicated region
        $region53: #{tpu_custom_call.1} parent=51 // pred_check
          %p467 = pneg %p175
        $region54: #{tpu_custom_call.1} parent=51 // pred_check_branch
          %469 = sbr.rel (%p467) target = $region56
        $region55: #{tpu_custom_call.1} parent=51 // pred_region
          %s470 = sand.u32 %s160, 1
          %s471 = scalar_lea.sflag [#allocation3], %s470
          %s472 = sand.u32 %s160, 1
          %s473 = smul.addr %s472, 16
          %s474 = scalar_lea.vmem [#allocation2], %s473
          %475 = dma.done %s471, 256
        $region56: #{tpu_custom_call.1} parent=51 // pred_fallthru
          _
      $region52: #{tpu_custom_call.1} parent=5 // pred_fallthru
        _
    $region6: #{tpu_custom_call.1} parent=1 // loop_footer
      %s19 = sadd.s32 1, %s15
    $region7: #{tpu_custom_call.1} parent=1 // loop_footer_branch
      %14 = sbr.rel target = $region3
    $region8: #{tpu_custom_call.1} parent=1 // loop_exit
      _
    %476 = vsyncpa [#allocation3], 1
    %s477 = scalar_lea.sflag [#allocation3], 1
    %478 = vsyncpa %s477, 1

</llo_original>
